<compile_context>
chip_gen: v6e
topology: v6e:2x2x1
jax: 0.10.0
libtpu: 0.0.40
codegen_flags: <defaults>
</compile_context>

<pallas_src>
import functools
import re

import jax
import jax.numpy as jnp
from jax.experimental import pallas as pl
from jax.experimental.pallas import tpu as pltpu


# ----------------------------------------------------------------------------
# Small helpers
# ----------------------------------------------------------------------------
def _round_up(v, m):
    return ((v + m - 1) // m) * m


def _pad_2d(a, rows, cols):
    r, c = a.shape
    return jnp.pad(a, ((0, rows - r), (0, cols - c)))


def _expand_att(att):
    """[H, O] attention vectors -> [H*O, H] block matrix so that
    (x_proj @ A)[n, h] == <x_proj[n, h*O:(h+1)*O], att[h]>."""
    h, o = att.shape
    eye = jnp.eye(h, dtype=att.dtype)
    return (att[:, :, None] * eye[:, None, :]).reshape(h * o, h)


def _tpu_vmem_and_generation():
    """(per-core VMEM capacity in bytes, TPU generation) with safe fallbacks."""
    gen = None
    try:
        kind = str(jax.devices()[0].device_kind)
        m = re.search(r"(\d+)", kind)
        if m:
            gen = int(m.group(1))
    except Exception:
        pass
    cap = None
    try:
        cap = int(pltpu.get_tpu_info().vmem_capacity_bytes)
    except Exception:
        cap = None
    if cap is None or cap <= 0:
        # v5e/v6e: 128 MiB; v7x (and unknown): conservative 64 MiB per TC.
        cap = {5: 128, 6: 128}.get(gen, 64) * (1 << 20)
    return cap, gen


def _adjacency_mask_i8(edge_index, n_pad):
    """Dense 0/1 int8 adjacency [dst, src] with self loops, built in one dtype
    (single O(N^2) wrapper pass; 1 byte/element HBM stream per layer)."""
    src, dst = edge_index[0], edge_index[1]
    diag = jnp.arange(n_pad, dtype=jnp.int32)
    return (jnp.zeros((n_pad, n_pad), jnp.int8)
            .at[dst, src].set(1)
            .at[diag, diag].set(1))


# ----------------------------------------------------------------------------
# VMEM budgeting / tile selection (generation-aware)
# ----------------------------------------------------------------------------
def _proj_vmem_bytes(rows, f, d, ho, n_alpha, in_itemsize):
    x_tiles = 2 * rows * f * in_itemsize         # double-buffered input rows
    w = 2 * f * d * 2                            # resident bf16 W_ext (2 bufs)
    acc = rows * d * 4                           # f32 matmul result
    feat = 2 * rows * ho * 2                     # bf16 feature output (2 bufs)
    alphas = 2 * rows * n_alpha * 4              # f32 alpha output (2 bufs)
    return x_tiles + w + acc + feat + alphas


def _attn_vmem_bytes(tile_m, n_pad, ho, heads, out_pad, cdt_bytes, out_bytes):
    mask = 2 * tile_m * n_pad                    # int8 adjacency, double-buffered
    edge = tile_m * n_pad                        # boolean edge mask
    scores = tile_m * n_pad * (2 * cdt_bytes + 4)  # e/p in cdt + f32 temp for sum
    feat = 2 * n_pad * ho * 2                    # resident bf16 source features
    alphas = 2 * (heads * n_pad + tile_m * heads) * 4
    outs = 2 * tile_m * out_pad * out_bytes
    return mask + edge + scores + feat + alphas + outs


def _choose_proj_tile(n_pad, f, d, ho, n_alpha, in_itemsize, budget, cap_rows=1024):
    cap = min(n_pad, cap_rows)
    cands = [t for t in range(128, cap + 1, 128) if n_pad % t == 0] or [128]
    best = cands[0]
    for t in cands:
        if _proj_vmem_bytes(t, f, d, ho, n_alpha, in_itemsize) <= budget:
            best = t
    return best


def _choose_tile_m(n_pad, dst_tile, fits):
    cap = min(_round_up(max(dst_tile, 128), 128), n_pad)
    if n_pad >= 256:
        cap = min(cap, n_pad // 2)   # >= 2 dst tiles so both v7x TCs get work
    cands = [t for t in range(128, cap + 1, 128) if n_pad % t == 0] or [128]
    best = cands[0]
    for t in cands:
        if fits(t):
            best = t                 # largest tile that fits the VMEM budget
    return best


def _vmem_limit(est, vmem_cap):
    # Always set a limit (v5e's default scoped budget is only 16 MiB), but
    # never request more than ~0.85x physical (v7x: 64 MiB per TC).
    return int(min(0.85 * vmem_cap, max(2 * est, 32 << 20)))


# ----------------------------------------------------------------------------
# Kernel 1: fused projection  x @ [W | W@A_src | W@A_dst]   (bf16 MXU, f32 acc)
#           -> (bf16 features [rows, H*O], f32 alphas [rows, 2H])
# ----------------------------------------------------------------------------
def _proj_kernel(x_ref, w_ref, feat_ref, alpha_ref, *, ho, n_alpha):
    x = x_ref[...].astype(jnp.bfloat16)
    w = w_ref[...].astype(jnp.bfloat16)
    xw = jnp.dot(x, w, preferred_element_type=jnp.float32)   # [rows, D_pad] f32
    feat_ref[...] = xw[:, :ho].astype(feat_ref.dtype)
    alpha_ref[...] = xw[:, ho:ho + n_alpha]


def _project(x_p, w_ext, ho, n_alpha, tile_rows, vmem_cap):
    n_pad, f = x_p.shape
    _, d = w_ext.shape
    est = _proj_vmem_bytes(tile_rows, f, d, ho, n_alpha, x_p.dtype.itemsize)
    kernel = functools.partial(_proj_kernel, ho=ho, n_alpha=n_alpha)
    return pl.pallas_call(
        kernel,
        out_shape=(jax.ShapeDtypeStruct((n_pad, ho), jnp.bfloat16),
                   jax.ShapeDtypeStruct((n_pad, n_alpha), jnp.float32)),
        grid=(n_pad // tile_rows,),
        in_specs=[
            pl.BlockSpec((tile_rows, f), lambda i: (i, 0)),   # node-row tile
            pl.BlockSpec((f, d), lambda i: (0, 0)),           # W_ext resident
        ],
        out_specs=(pl.BlockSpec((tile_rows, ho), lambda i: (i, 0)),
                   pl.BlockSpec((tile_rows, n_alpha), lambda i: (i, 0))),
        compiler_params=pltpu.CompilerParams(
            dimension_semantics=("parallel",),
            vmem_limit_bytes=_vmem_limit(est, vmem_cap)),
    )(x_p, w_ext)


# ----------------------------------------------------------------------------
# Kernel 2: attention + softmax + aggregation + bias (+ELU) per dst-node tile
# ----------------------------------------------------------------------------
def _gat_attn_kernel(feat_ref, asrct_ref, adst_ref, mask_ref, bias_ref, o_ref,
                     *, heads, out_ch, concat, apply_elu, out_dim, out_pad, cdt):
    neg = jnp.asarray(-1e9, dtype=cdt)
    feat = feat_ref[...]                               # [N, H*O] bf16 (resident)
    a_src_t = asrct_ref[...].astype(cdt)               # [H, N]
    a_dst = adst_ref[...].astype(cdt)                  # [Tm, H]
    edge = mask_ref[...] > 0                           # [Tm, N] bool, once/tile

    head_outs = []
    acc = None
    for h in range(heads):                             # one head's [Tm,N] alive
        e = a_dst[:, h:h + 1] + a_src_t[h:h + 1, :]    # e[j,i] = ad[j] + as[i]
        e = jnp.maximum(e, 0.2 * e)                    # LeakyReLU(0.2)
        e = jnp.where(edge, e, neg)                    # mask non-edges
        e = e - jnp.max(e, axis=1, keepdims=True)      # stable softmax (exact)
        p = jnp.exp(e)                                 # cdt (bf16 on v6e/v7x)
        denom = jnp.sum(p, axis=1, keepdims=True, dtype=jnp.float32)
        inv = pl.reciprocal(denom, approx=True)        # [Tm,1] f32
        # bf16 aggregation matmul (K = N), f32 accumulate; 1/sum folded after.
        agg = jnp.dot(p.astype(jnp.bfloat16),
                      feat[:, h * out_ch:(h + 1) * out_ch],
                      preferred_element_type=jnp.float32)   # [Tm, O]
        out_h = agg * inv
        if concat:
            head_outs.append(out_h)
        else:
            acc = out_h if acc is None else acc + out_h

    out = jnp.concatenate(head_outs, axis=1) if concat else acc * (1.0 / heads)
    out = out + bias_ref[...]                          # broadcast [1, out_dim]
    if apply_elu:                                      # fused F.elu
        out = jnp.where(out > 0, out, jnp.exp(jnp.minimum(out, 0.0)) - 1.0)
    if out_pad > out_dim:                              # lane-dense padded store
        out = jnp.concatenate(
            [out, jnp.zeros((out.shape[0], out_pad - out_dim), out.dtype)],
            axis=1)
    o_ref[...] = out.astype(o_ref.dtype)


def _gat_attention(feat, a_src_t, a_dst, mask_i8, bias, *, heads, out_ch,
                   concat, apply_elu, tile_m, cdt, out_dtype, vmem_cap):
    n_pad, ho = feat.shape
    out_dim = heads * out_ch if concat else out_ch
    out_pad = _round_up(out_dim, 128)
    est = _attn_vmem_bytes(tile_m, n_pad, ho, heads, out_pad,
                           jnp.dtype(cdt).itemsize, jnp.dtype(out_dtype).itemsize)
    kernel = functools.partial(_gat_attn_kernel, heads=heads, out_ch=out_ch,
                               concat=concat, apply_elu=apply_elu,
                               out_dim=out_dim, out_pad=out_pad, cdt=cdt)
    return pl.pallas_call(
        kernel,
        out_shape=jax.ShapeDtypeStruct((n_pad, out_pad), out_dtype),
        grid=(n_pad // tile_m,),
        in_specs=[
            pl.BlockSpec((n_pad, ho), lambda i: (0, 0)),      # src feats (bf16)
            pl.BlockSpec((heads, n_pad), lambda i: (0, 0)),   # alpha_src^T f32
            pl.BlockSpec((tile_m, heads), lambda i: (i, 0)),  # alpha_dst tile
            pl.BlockSpec((tile_m, n_pad), lambda i: (i, 0)),  # int8 adjacency
            pl.BlockSpec((1, out_dim), lambda i: (0, 0)),     # bias
        ],
        out_specs=pl.BlockSpec((tile_m, out_pad), lambda i: (i, 0)),
        compiler_params=pltpu.CompilerParams(
            dimension_semantics=("parallel",),
            vmem_limit_bytes=_vmem_limit(est, vmem_cap)),
    )(feat, a_src_t, a_dst, mask_i8, bias)


# ----------------------------------------------------------------------------
# GATBlock forward (params, adjacency glue)
# ----------------------------------------------------------------------------
def init_gat_block_params(key, in_channels, out_channels, heads):
    ks = jax.random.split(key, 8)
    s = 0.1
    return {
        # layer 1: GATConv(in, out, heads=H, concat=True)
        "w1":  s * jax.random.normal(ks[0], (in_channels, heads * out_channels), jnp.float32),
        "as1": s * jax.random.normal(ks[1], (heads, out_channels), jnp.float32),
        "ad1": s * jax.random.normal(ks[2], (heads, out_channels), jnp.float32),
        "b1":  s * jax.random.normal(ks[3], (1, heads * out_channels), jnp.float32),
        # layer 2: GATConv(out*H, out, heads=1, concat=False)
        "w2":  s * jax.random.normal(ks[4], (heads * out_channels, out_channels), jnp.float32),
        "as2": s * jax.random.normal(ks[5], (1, out_channels), jnp.float32),
        "ad2": s * jax.random.normal(ks[6], (1, out_channels), jnp.float32),
        "b2":  s * jax.random.normal(ks[7], (1, out_channels), jnp.float32),
    }


def gat_block_forward(params, x, edge_index, *, out_channels, heads,
                      dst_tile=256):
    n, f_in = x.shape
    vmem_cap, gen = _tpu_vmem_and_generation()
    # bf16 elementwise softmax only where the VPU/EUP are bf16-native (v6e+);
    # v5e (and unknown chips) keep the elementwise chain in f32.
    cdt = jnp.bfloat16 if (gen is not None and gen >= 6) else jnp.float32

    n_pad = _round_up(n, 128)                 # lane-dense mask/score tiles
    ho1 = heads * out_channels
    out_pad1 = _round_up(ho1, 128)
    out_pad2 = _round_up(out_channels, 128)
    budget = int(0.7 * vmem_cap)

    def attn_fits(t):
        b1 = _attn_vmem_bytes(t, n_pad, ho1, heads, out_pad1,
                              jnp.dtype(cdt).itemsize, 2)
        b2 = _attn_vmem_bytes(t, n_pad, out_channels, 1, out_pad2,
                              jnp.dtype(cdt).itemsize, 4)
        return max(b1, b2) <= budget

    tile_m = _choose_tile_m(n_pad, dst_tile, attn_fits)

    # int8 0/1 adjacency with self loops; shared by both layers, expanded to
    # the additive softmax mask inside the attention kernel.
    mask_i8 = _adjacency_mask_i8(edge_index, n_pad)

    x_p = jnp.pad(x, ((0, n_pad - n), (0, 0)))            # zero-pad node rows

    # ------------------------------- layer 1 -------------------------------
    d1 = _round_up(ho1 + 2 * heads, 128)
    w1e = jnp.concatenate([params["w1"],
                           params["w1"] @ _expand_att(params["as1"]),
                           params["w1"] @ _expand_att(params["ad1"])], axis=1)
    w1e = _pad_2d(w1e, f_in, d1).astype(jnp.bfloat16)
    pt1 = _choose_proj_tile(n_pad, f_in, d1, ho1, 2 * heads, 4, budget)
    feat1, alphas1 = _project(x_p, w1e, ho1, 2 * heads, pt1, vmem_cap)
    h1 = _gat_attention(
        feat1,                                             # bf16 [N, H*O]
        alphas1[:, :heads].T,                              # alpha_src^T [H, N]
        alphas1[:, heads:],                                # alpha_dst   [N, H]
        mask_i8, params["b1"],
        heads=heads, out_ch=out_channels, concat=True, apply_elu=True,
        tile_m=tile_m, cdt=cdt, out_dtype=jnp.bfloat16,
        vmem_cap=vmem_cap)                                 # bf16 [N, 128] slab

    # ------------------------------- layer 2 -------------------------------
    d2 = _round_up(out_channels + 2, 128)
    w2e = jnp.concatenate([params["w2"],
                           params["w2"] @ _expand_att(params["as2"]),
                           params["w2"] @ _expand_att(params["ad2"])], axis=1)
    # Row-pad W2 so the lane-padded (zero-column) bf16 h1 slab feeds it directly.
    w2e = _pad_2d(w2e, h1.shape[1], d2).astype(jnp.bfloat16)
    pt2 = _choose_proj_tile(n_pad, h1.shape[1], d2, out_channels, 2, 2, budget)
    feat2, alphas2 = _project(h1, w2e, out_channels, 2, pt2, vmem_cap)
    h2 = _gat_attention(
        feat2,
        alphas2[:, :1].T,
        alphas2[:, 1:],
        mask_i8, params["b2"],
        heads=1, out_ch=out_channels, concat=False, apply_elu=False,
        tile_m=tile_m, cdt=cdt, out_dtype=jnp.float32, vmem_cap=vmem_cap)
    return h2[:n, :out_channels]


# ----------------------------------------------------------------------------
# Pure-JAX f32 reference (same dense-softmax math) for a sanity check
# ----------------------------------------------------------------------------
def _ref_gat_conv(x, w, att_s, att_d, bias, maskb, heads, out_ch, concat, elu):
    n = x.shape[0]
    xp = (x @ w).reshape(n, heads, out_ch)
    a_s = jnp.einsum("nho,ho->nh", xp, att_s)
    a_d = jnp.einsum("nho,ho->nh", xp, att_d)
    e = a_d[:, None, :] + a_s[None, :, :]                 # [dst, src, H]
    e = jnp.where(e > 0, e, 0.2 * e) + maskb[:, :, None]
    p = jax.nn.softmax(e, axis=1)
    out = jnp.einsum("jih,iho->jho", p, xp)
    out = out.reshape(n, heads * out_ch) if concat else out.mean(axis=1)
    out = out + bias.reshape(-1)
    return jax.nn.elu(out) if elu else out


def _ref_forward(params, x, edge_index, out_channels, heads):
    n = x.shape[0]
    adj = _adjacency_mask_i8(edge_index, n).astype(jnp.float32)
    maskb = jnp.where(adj > 0, 0.0, -1e9)
    h1 = _ref_gat_conv(x, params["w1"], params["as1"], params["ad1"],
                       params["b1"], maskb, heads, out_channels, True, True)
    h2 = _ref_gat_conv(h1, params["w2"], params["as2"], params["ad2"],
                       params["b2"], maskb, 1, out_channels, False, False)
    return h2


# ----------------------------------------------------------------------------
if __name__ == "__main__":
    N, IN_CH, OUT_CH, HEADS = 160, 8, 8, 4        # n_pad=256 -> 2 dst tiles

    key = jax.random.PRNGKey(0)
    kx, kp = jax.random.split(key)

    x = jax.random.normal(kx, (N, IN_CH), jnp.float32)

    # Ring graph, both directions: 2N directed edges. edge_index: [2, E].
    idx = jnp.arange(N, dtype=jnp.int32)
    src = jnp.concatenate([idx, (idx + 1) % N])
    dst = jnp.concatenate([(idx + 1) % N, idx])
    edge_index = jnp.stack([src, dst], axis=0)    # [2, 320]

    params = init_gat_block_params(kp, IN_CH, OUT_CH, HEADS)

    out = gat_block_forward(params, x, edge_index,
                            out_channels=OUT_CH, heads=HEADS, dst_tile=128)
    out = jax.block_until_ready(out)

    ref = _ref_forward(params, x, edge_index, OUT_CH, HEADS)
    assert out.shape == (N, OUT_CH)
    # bf16 matmuls / bf16 softmax (v6e+) + approx reciprocal -> loose tolerance.
    assert jnp.allclose(out, ref, atol=2e-2, rtol=2e-2), "mismatch vs reference"

    print("KERNEL_OK")
</pallas_src>

<mosaic_0001>
module attributes {stable_mosaic.version = 11 : i64} {
  func.func @_proj_kernel(%arg0: i32, %arg1: memref<256x8xf32, #tpu.memory_space<vmem>>, %arg2: memref<8x128xbf16, #tpu.memory_space<vmem>>, %arg3: memref<256x32xbf16, #tpu.memory_space<vmem>>, %arg4: memref<256x8xf32, #tpu.memory_space<vmem>>) attributes {dimension_semantics = [#tpu.dimension_semantics<parallel>], iteration_bounds = array<i64: 1>, scalar_prefetch = 0 : i64, scratch_operands = 0 : i64, tpu.core_type = #tpu.core_type<tc>, window_params = [{transform_indices = @transform_0, window_bounds = array<i64: 256, 8>}, {pipeline_mode = #tpu.pipeline_mode<synchronous>, transform_indices = @transform_1, window_bounds = array<i64: 8, 128>}, {transform_indices = @transform_2, window_bounds = array<i64: 256, 32>}, {transform_indices = @transform_3, window_bounds = array<i64: 256, 8>}]} {
    %c0 = arith.constant 0 : index
    %c0_0 = arith.constant 0 : index
    %0 = vector.load %arg1[%c0, %c0_0] : memref<256x8xf32, #tpu.memory_space<vmem>>, vector<256x8xf32>
    %1 = arith.truncf %0 : vector<256x8xf32> to vector<256x8xbf16>
    %c0_1 = arith.constant 0 : index
    %c0_2 = arith.constant 0 : index
    %2 = vector.load %arg2[%c0_1, %c0_2] : memref<8x128xbf16, #tpu.memory_space<vmem>>, vector<8x128xbf16>
    %cst = arith.constant dense<0.000000e+00> : vector<256x128xf32>
    %3 = tpu.matmul %1, %2, %cst {dimension_numbers = #tpu.dot_dimension_numbers<[1], [0], [0], [1], [0, 0, 1, 1], [], []>} : vector<256x8xbf16>, vector<8x128xbf16>, vector<256x128xf32> -> vector<256x128xf32>
    %4 = vector.extract_strided_slice %3 {offsets = [0, 0], sizes = [256, 32], strides = [1, 1]} : vector<256x128xf32> to vector<256x32xf32>
    %5 = arith.truncf %4 : vector<256x32xf32> to vector<256x32xbf16>
    %c0_3 = arith.constant 0 : index
    %c0_4 = arith.constant 0 : index
    %6 = vector.load %arg3[%c0_3, %c0_4] : memref<256x32xbf16, #tpu.memory_space<vmem>>, vector<256x32xbf16>
    tpu.vector_store %arg3[%c0_3, %c0_4], %5 {strides = array<i32>} : memref<256x32xbf16, #tpu.memory_space<vmem>>, vector<256x32xbf16>,
    %7 = vector.extract_strided_slice %3 {offsets = [0, 32], sizes = [256, 8], strides = [1, 1]} : vector<256x128xf32> to vector<256x8xf32>
    %c0_5 = arith.constant 0 : index
    %c0_6 = arith.constant 0 : index
    %8 = vector.load %arg4[%c0_5, %c0_6] : memref<256x8xf32, #tpu.memory_space<vmem>>, vector<256x8xf32>
    tpu.vector_store %arg4[%c0_5, %c0_6], %7 {strides = array<i32>} : memref<256x8xf32, #tpu.memory_space<vmem>>, vector<256x8xf32>,
    return
  }
  func.func @transform_0(%arg0: i32) -> (i32, i32) {
    %c0_i32 = arith.constant 0 : i32
    %c0_i32_0 = arith.constant 0 : i32
    return %arg0, %c0_i32 : i32, i32
  }
  func.func @transform_1(%arg0: i32) -> (i32, i32) {
    %c0_i32 = arith.constant 0 : i32
    %c0_i32_0 = arith.constant 0 : i32
    %c0_i32_1 = arith.constant 0 : i32
    return %c0_i32, %c0_i32_0 : i32, i32
  }
  func.func @transform_2(%arg0: i32) -> (i32, i32) {
    %c0_i32 = arith.constant 0 : i32
    %c0_i32_0 = arith.constant 0 : i32
    return %arg0, %c0_i32 : i32, i32
  }
  func.func @transform_3(%arg0: i32) -> (i32, i32) {
    %c0_i32 = arith.constant 0 : i32
    %c0_i32_0 = arith.constant 0 : i32
    return %arg0, %c0_i32 : i32, i32
  }
}

</mosaic_0001>

<llo_original>
// kernel: tpu_custom_call.1
$region0: #{tpu_custom_call.1}
  #allocation0 [shape = 'u32[]', space=smem, size = 0x4, offset = 0x4, fixed_abs, tag = 'smem constant byte address 0x4 - core index']
  #allocation1 [shape = 'u32[144,128]{1,0:T(1,128)}', space=vmem, size = 0x12000, scoped, tag = 'internal scratch']
  %s0 = inlined_call_operand.vmem [shape: f32[256,8], index: 0, kind: input, shape index: {}]
  %s1 = inlined_call_operand.vmem [shape: bf16[8,128], index: 1, kind: input, shape index: {}]
  %s2 = inlined_call_operand.vmem [shape: bf16[256,32], index: 2, kind: output, shape index: {0}]
  %s3 = inlined_call_operand.vmem [shape: f32[256,8], index: 3, kind: output, shape index: {1}]
  %4 = xla_tuple %s2, %s3
  %s5 = sld [smem:[#allocation0]]
  $region26: #{tpu_custom_call.1} parent=0
    _
  %s7 = ssub.s32 1, %s5
  %s8 = scalar_select 0, %s7, %s5
  // Predicated region
  $region2: #{tpu_custom_call.1} parent=0 // pred_check
    _
  $region3: #{tpu_custom_call.1} parent=0 // pred_check_branch
    %10 = sbr.rel (0) target = $region5
  $region4: #{tpu_custom_call.1} parent=0 // pred_region
    _
  $region5: #{tpu_custom_call.1} parent=0 // pred_fallthru
    _
  // Predicated region
  $region6: #{tpu_custom_call.1} parent=0 // pred_check
    _
  $region7: #{tpu_custom_call.1} parent=0 // pred_check_branch
    %12 = sbr.rel (0) target = $region9
  $region8: #{tpu_custom_call.1} parent=0 // pred_region
    _
  $region9: #{tpu_custom_call.1} parent=0 // pred_fallthru
    _
  %v14 = vld [vmem:[%s0] sm:$0xff]
  %v15 = vld [vmem:[%s0 + $0x8] sm:$0xff]
  %v16 = vld [vmem:[%s0 + $0x10] sm:$0xff]
  %v17 = vld [vmem:[%s0 + $0x18] sm:$0xff]
  %v18 = vld [vmem:[%s0 + $0x20] sm:$0xff]
  %v19 = vld [vmem:[%s0 + $0x28] sm:$0xff]
  %v20 = vld [vmem:[%s0 + $0x30] sm:$0xff]
  %v21 = vld [vmem:[%s0 + $0x38] sm:$0xff]
  %v22 = vld [vmem:[%s0 + $0x40] sm:$0xff]
  %v23 = vld [vmem:[%s0 + $0x48] sm:$0xff]
  %v24 = vld [vmem:[%s0 + $0x50] sm:$0xff]
  %v25 = vld [vmem:[%s0 + $0x58] sm:$0xff]
  %v26 = vld [vmem:[%s0 + $0x60] sm:$0xff]
  %v27 = vld [vmem:[%s0 + $0x68] sm:$0xff]
  %v28 = vld [vmem:[%s0 + $0x70] sm:$0xff]
  %v29 = vld [vmem:[%s0 + $0x78] sm:$0xff]
  %v30 = vld [vmem:[%s0 + $0x80] sm:$0xff]
  %v31 = vld [vmem:[%s0 + $0x88] sm:$0xff]
  %v32 = vld [vmem:[%s0 + $0x90] sm:$0xff]
  %v33 = vld [vmem:[%s0 + $0x98] sm:$0xff]
  %v34 = vld [vmem:[%s0 + $0xa0] sm:$0xff]
  %v35 = vld [vmem:[%s0 + $0xa8] sm:$0xff]
  %v36 = vld [vmem:[%s0 + $0xb0] sm:$0xff]
  %v37 = vld [vmem:[%s0 + $0xb8] sm:$0xff]
  %v38 = vld [vmem:[%s0 + $0xc0] sm:$0xff]
  %v39 = vld [vmem:[%s0 + $0xc8] sm:$0xff]
  %v40 = vld [vmem:[%s0 + $0xd0] sm:$0xff]
  %v41 = vld [vmem:[%s0 + $0xd8] sm:$0xff]
  %v42 = vld [vmem:[%s0 + $0xe0] sm:$0xff]
  %v43 = vld [vmem:[%s0 + $0xe8] sm:$0xff]
  %v44 = vld [vmem:[%s0 + $0xf0] sm:$0xff]
  %v45 = vld [vmem:[%s0 + $0xf8] sm:$0xff]
  %v46 = vpack.c.bf16 %v15, %v14
  %v47 = vpack.c.bf16 %v17, %v16
  %v48 = vpack.c.bf16 %v19, %v18
  %v49 = vpack.c.bf16 %v21, %v20
  %v50 = vpack.c.bf16 %v23, %v22
  %v51 = vpack.c.bf16 %v25, %v24
  %v52 = vpack.c.bf16 %v27, %v26
  %v53 = vpack.c.bf16 %v29, %v28
  %v54 = vpack.c.bf16 %v31, %v30
  %v55 = vpack.c.bf16 %v33, %v32
  %v56 = vpack.c.bf16 %v35, %v34
  %v57 = vpack.c.bf16 %v37, %v36
  %v58 = vpack.c.bf16 %v39, %v38
  %v59 = vpack.c.bf16 %v41, %v40
  %v60 = vpack.c.bf16 %v43, %v42
  %v61 = vpack.c.bf16 %v45, %v44
  %v62 = vld [vmem:[%s1] sm:$0xf]
  %vm63 = vcmask 64512
  %v65 = vsel %vm63, %v46, 0
  %v68 = vsel %vm63, %v47, 0
  %v71 = vsel %vm63, %v48, 0
  %v74 = vsel %vm63, %v49, 0
  %v77 = vsel %vm63, %v50, 0
  %v80 = vsel %vm63, %v51, 0
  %v83 = vsel %vm63, %v52, 0
  %v86 = vsel %vm63, %v53, 0
  %v89 = vsel %vm63, %v54, 0
  %v92 = vsel %vm63, %v55, 0
  %v95 = vsel %vm63, %v56, 0
  %v98 = vsel %vm63, %v57, 0
  %v101 = vsel %vm63, %v58, 0
  %v104 = vsel %vm63, %v59, 0
  %v107 = vsel %vm63, %v60, 0
  %v110 = vsel %vm63, %v61, 0
  %vm112 = vcmask 1043456
  %v114 = vsel %vm112, %v62, 0
  %116 = vmatprep.subr.bf16.mxu0 0
  %117 = vmatpush1.bf16.msra.mxu0 0
  %118 = vmatprep.subr.bf16.mxu0 0
  %119 = vmatpush1.bf16.msra.mxu0 0
  %120 = vmatprep.subr.bf16.mxu0 0
  %121 = vmatpush1.bf16.msra.mxu0 0
  %122 = vmatprep.subr.bf16.mxu0 0
  %123 = vmatpush1.bf16.msra.mxu0 0
  %124 = vmatprep.subr.bf16.mxu0 0
  %125 = vmatpush1.bf16.msra.mxu0 0
  %126 = vmatprep.subr.bf16.mxu0 0
  %127 = vmatpush1.bf16.msra.mxu0 0
  %128 = vmatprep.subr.bf16.mxu0 0
  %129 = vmatpush1.bf16.msra.mxu0 0
  %130 = vmatprep.subr.bf16.mxu0 0
  %131 = vmatpush1.bf16.msra.mxu0 %v114
  %132 = vmatprep.subr.bf16.mxu0 0
  %133 = vmatpush2.bf16.msra.mxu0 0
  %134 = vmatprep.subr.bf16.mxu0 0
  %135 = vmatpush2.bf16.msra.mxu0 0
  %136 = vmatprep.subr.bf16.mxu0 0
  %137 = vmatpush2.bf16.msra.mxu0 0
  %138 = vmatprep.subr.bf16.mxu0 0
  %139 = vmatpush2.bf16.msra.mxu0 0
  %140 = vmatprep.subr.bf16.mxu0 0
  %141 = vmatpush2.bf16.msra.mxu0 0
  %142 = vmatprep.subr.bf16.mxu0 0
  %143 = vmatpush2.bf16.msra.mxu0 0
  %144 = vmatprep.subr.bf16.mxu0 0
  %145 = vmatpush2.bf16.msra.mxu0 0
  %146 = vmatprep.subr.bf16.mxu0 0
  %147 = vmatpush2.bf16.msra.mxu0 0
  %148 = vmatprep.mubr.bf16.mxu0 0
  %149 = vmatmul.mubr.bf16.gmra.mxu0 %v65
  %v150 = vpop.f32.mrf.mxu0
  %v151 = vadd.f32 0.0, %v150
  %v152 = vpop.f32.mrf.mxu0
  %v153 = vpop.f32.mrf.mxu0
  %v154 = vadd.f32 0.0, %v153
  %v155 = vpop.f32.mrf.mxu0
  %156 = vmatprep.mubr.bf16.mxu0 0
  %157 = vmatmul.mubr.bf16.gmra.mxu0 %v68
  %v158 = vpop.f32.mrf.mxu0
  %v159 = vadd.f32 0.0, %v158
  %v160 = vpop.f32.mrf.mxu0
  %v161 = vpop.f32.mrf.mxu0
  %v162 = vadd.f32 0.0, %v161
  %v163 = vpop.f32.mrf.mxu0
  %164 = vmatprep.mubr.bf16.mxu0 0
  %165 = vmatmul.mubr.bf16.gmra.mxu0 %v71
  %v166 = vpop.f32.mrf.mxu0
  %v167 = vadd.f32 0.0, %v166
  %v168 = vpop.f32.mrf.mxu0
  %v169 = vpop.f32.mrf.mxu0
  %v170 = vadd.f32 0.0, %v169
  %v171 = vpop.f32.mrf.mxu0
  %172 = vmatprep.mubr.bf16.mxu0 0
  %173 = vmatmul.mubr.bf16.gmra.mxu0 %v74
  %v174 = vpop.f32.mrf.mxu0
  %v175 = vadd.f32 0.0, %v174
  %v176 = vpop.f32.mrf.mxu0
  %v177 = vpop.f32.mrf.mxu0
  %v178 = vadd.f32 0.0, %v177
  %v179 = vpop.f32.mrf.mxu0
  %180 = vmatprep.mubr.bf16.mxu0 0
  %181 = vmatmul.mubr.bf16.gmra.mxu0 %v77
  %v182 = vpop.f32.mrf.mxu0
  %v183 = vadd.f32 0.0, %v182
  %v184 = vpop.f32.mrf.mxu0
  %v185 = vpop.f32.mrf.mxu0
  %v186 = vadd.f32 0.0, %v185
  %v187 = vpop.f32.mrf.mxu0
  %188 = vmatprep.mubr.bf16.mxu0 0
  %189 = vmatmul.mubr.bf16.gmra.mxu0 %v80
  %v190 = vpop.f32.mrf.mxu0
  %v191 = vadd.f32 0.0, %v190
  %v192 = vpop.f32.mrf.mxu0
  %v193 = vpop.f32.mrf.mxu0
  %v194 = vadd.f32 0.0, %v193
  %v195 = vpop.f32.mrf.mxu0
  %196 = vmatprep.mubr.bf16.mxu0 0
  %197 = vmatmul.mubr.bf16.gmra.mxu0 %v83
  %v198 = vpop.f32.mrf.mxu0
  %v199 = vadd.f32 0.0, %v198
  %v200 = vpop.f32.mrf.mxu0
  %v201 = vpop.f32.mrf.mxu0
  %v202 = vadd.f32 0.0, %v201
  %v203 = vpop.f32.mrf.mxu0
  %204 = vmatprep.mubr.bf16.mxu0 0
  %205 = vmatmul.mubr.bf16.gmra.mxu0 %v86
  %v206 = vpop.f32.mrf.mxu0
  %v207 = vadd.f32 0.0, %v206
  %v208 = vpop.f32.mrf.mxu0
  %v209 = vpop.f32.mrf.mxu0
  %v210 = vadd.f32 0.0, %v209
  %v211 = vpop.f32.mrf.mxu0
  %212 = vmatprep.mubr.bf16.mxu0 0
  %213 = vmatmul.mubr.bf16.gmra.mxu0 %v89
  %v214 = vpop.f32.mrf.mxu0
  %v215 = vadd.f32 0.0, %v214
  %v216 = vpop.f32.mrf.mxu0
  %v217 = vpop.f32.mrf.mxu0
  %v218 = vadd.f32 0.0, %v217
  %v219 = vpop.f32.mrf.mxu0
  %220 = vmatprep.mubr.bf16.mxu0 0
  %221 = vmatmul.mubr.bf16.gmra.mxu0 %v92
  %v222 = vpop.f32.mrf.mxu0
  %v223 = vadd.f32 0.0, %v222
  %v224 = vpop.f32.mrf.mxu0
  %v225 = vpop.f32.mrf.mxu0
  %v226 = vadd.f32 0.0, %v225
  %v227 = vpop.f32.mrf.mxu0
  %228 = vmatprep.mubr.bf16.mxu0 0
  %229 = vmatmul.mubr.bf16.gmra.mxu0 %v95
  %v230 = vpop.f32.mrf.mxu0
  %v231 = vadd.f32 0.0, %v230
  %v232 = vpop.f32.mrf.mxu0
  %v233 = vpop.f32.mrf.mxu0
  %v234 = vadd.f32 0.0, %v233
  %v235 = vpop.f32.mrf.mxu0
  %236 = vmatprep.mubr.bf16.mxu0 0
  %237 = vmatmul.mubr.bf16.gmra.mxu0 %v98
  %v238 = vpop.f32.mrf.mxu0
  %v239 = vadd.f32 0.0, %v238
  %v240 = vpop.f32.mrf.mxu0
  %v241 = vpop.f32.mrf.mxu0
  %v242 = vadd.f32 0.0, %v241
  %v243 = vpop.f32.mrf.mxu0
  %244 = vmatprep.mubr.bf16.mxu0 0
  %245 = vmatmul.mubr.bf16.gmra.mxu0 %v101
  %v246 = vpop.f32.mrf.mxu0
  %v247 = vadd.f32 0.0, %v246
  %v248 = vpop.f32.mrf.mxu0
  %v249 = vpop.f32.mrf.mxu0
  %v250 = vadd.f32 0.0, %v249
  %v251 = vpop.f32.mrf.mxu0
  %252 = vmatprep.mubr.bf16.mxu0 0
  %253 = vmatmul.mubr.bf16.gmra.mxu0 %v104
  %v254 = vpop.f32.mrf.mxu0
  %v255 = vadd.f32 0.0, %v254
  %v256 = vpop.f32.mrf.mxu0
  %v257 = vpop.f32.mrf.mxu0
  %v258 = vadd.f32 0.0, %v257
  %v259 = vpop.f32.mrf.mxu0
  %260 = vmatprep.mubr.bf16.mxu0 0
  %261 = vmatmul.mubr.bf16.gmra.mxu0 %v107
  %v262 = vpop.f32.mrf.mxu0
  %v263 = vadd.f32 0.0, %v262
  %v264 = vpop.f32.mrf.mxu0
  %v265 = vpop.f32.mrf.mxu0
  %v266 = vadd.f32 0.0, %v265
  %v267 = vpop.f32.mrf.mxu0
  %268 = vmatprep.mubr.bf16.mxu0 0
  %269 = vmatmul.mubr.bf16.gmra.mxu0 %v110
  %v270 = vpop.f32.mrf.mxu0
  %v271 = vadd.f32 0.0, %v270
  %v272 = vpop.f32.mrf.mxu0
  %v273 = vpop.f32.mrf.mxu0
  %v274 = vadd.f32 0.0, %v273
  %v275 = vpop.f32.mrf.mxu0
  %276 = vdwg.mxu0
  %v277 = vpack.c.bf16 %v154, %v151
  %v278 = vpack.c.bf16 %v162, %v159
  %v279 = vpack.c.bf16 %v170, %v167
  %v280 = vpack.c.bf16 %v178, %v175
  %v281 = vpack.c.bf16 %v186, %v183
  %v282 = vpack.c.bf16 %v194, %v191
  %v283 = vpack.c.bf16 %v202, %v199
  %v284 = vpack.c.bf16 %v210, %v207
  %v285 = vpack.c.bf16 %v218, %v215
  %v286 = vpack.c.bf16 %v226, %v223
  %v287 = vpack.c.bf16 %v234, %v231
  %v288 = vpack.c.bf16 %v242, %v239
  %v289 = vpack.c.bf16 %v250, %v247
  %v290 = vpack.c.bf16 %v258, %v255
  %v291 = vpack.c.bf16 %v266, %v263
  %v292 = vpack.c.bf16 %v274, %v271
  %v309 = vunpack.c.l.b16 %v277
  %v310 = vunpack.c.h.b16 %v277
  %v311 = vunpack.c.l.b16 %v278
  %v312 = vunpack.c.h.b16 %v278
  %v313 = vunpack.c.l.b16 %v279
  %v314 = vunpack.c.h.b16 %v279
  %v315 = vunpack.c.l.b16 %v280
  %v316 = vunpack.c.h.b16 %v280
  %v317 = vunpack.c.l.b16 %v281
  %v318 = vunpack.c.h.b16 %v281
  %v319 = vunpack.c.l.b16 %v282
  %v320 = vunpack.c.h.b16 %v282
  %v321 = vunpack.c.l.b16 %v283
  %v322 = vunpack.c.h.b16 %v283
  %v323 = vunpack.c.l.b16 %v284
  %v324 = vunpack.c.h.b16 %v284
  %v325 = vunpack.c.l.b16 %v285
  %v326 = vunpack.c.h.b16 %v285
  %v327 = vunpack.c.l.b16 %v286
  %v328 = vunpack.c.h.b16 %v286
  %v329 = vunpack.c.l.b16 %v287
  %v330 = vunpack.c.h.b16 %v287
  %v331 = vunpack.c.l.b16 %v288
  %v332 = vunpack.c.h.b16 %v288
  %v333 = vunpack.c.l.b16 %v289
  %v334 = vunpack.c.h.b16 %v289
  %v335 = vunpack.c.l.b16 %v290
  %v336 = vunpack.c.h.b16 %v290
  %v337 = vunpack.c.l.b16 %v291
  %v338 = vunpack.c.h.b16 %v291
  %v339 = vunpack.c.l.b16 %v292
  %v340 = vunpack.c.h.b16 %v292
  %v341 = vpack.c.b16 %v309, %v309
  %v342 = vpack.c.b16 %v310, %v310
  %v343 = vpack.c.b16 %v311, %v311
  %v344 = vpack.c.b16 %v312, %v312
  %v345 = vpack.c.b16 %v313, %v313
  %v346 = vpack.c.b16 %v314, %v314
  %v347 = vpack.c.b16 %v315, %v315
  %v348 = vpack.c.b16 %v316, %v316
  %v349 = vpack.c.b16 %v317, %v317
  %v350 = vpack.c.b16 %v318, %v318
  %v351 = vpack.c.b16 %v319, %v319
  %v352 = vpack.c.b16 %v320, %v320
  %v353 = vpack.c.b16 %v321, %v321
  %v354 = vpack.c.b16 %v322, %v322
  %v355 = vpack.c.b16 %v323, %v323
  %v356 = vpack.c.b16 %v324, %v324
  %v357 = vpack.c.b16 %v325, %v325
  %v358 = vpack.c.b16 %v326, %v326
  %v359 = vpack.c.b16 %v327, %v327
  %v360 = vpack.c.b16 %v328, %v328
  %v361 = vpack.c.b16 %v329, %v329
  %v362 = vpack.c.b16 %v330, %v330
  %v363 = vpack.c.b16 %v331, %v331
  %v364 = vpack.c.b16 %v332, %v332
  %v365 = vpack.c.b16 %v333, %v333
  %v366 = vpack.c.b16 %v334, %v334
  %v367 = vpack.c.b16 %v335, %v335
  %v368 = vpack.c.b16 %v336, %v336
  %v369 = vpack.c.b16 %v337, %v337
  %v370 = vpack.c.b16 %v338, %v338
  %v371 = vpack.c.b16 %v339, %v339
  %v372 = vpack.c.b16 %v340, %v340
  %vm405 = vcmask 257024
  %406 = vst.msk [vmem:[%s2] sm:$0xf] %vm405, %v341
  %407 = vst.msk [vmem:[%s2 + $0x4] sm:$0xf] %vm405, %v342
  %408 = vst.msk [vmem:[%s2 + $0x8] sm:$0xf] %vm405, %v343
  %409 = vst.msk [vmem:[%s2 + $0xc] sm:$0xf] %vm405, %v344
  %410 = vst.msk [vmem:[%s2 + $0x10] sm:$0xf] %vm405, %v345
  %411 = vst.msk [vmem:[%s2 + $0x14] sm:$0xf] %vm405, %v346
  %412 = vst.msk [vmem:[%s2 + $0x18] sm:$0xf] %vm405, %v347
  %413 = vst.msk [vmem:[%s2 + $0x1c] sm:$0xf] %vm405, %v348
  %414 = vst.msk [vmem:[%s2 + $0x20] sm:$0xf] %vm405, %v349
  %415 = vst.msk [vmem:[%s2 + $0x24] sm:$0xf] %vm405, %v350
  %416 = vst.msk [vmem:[%s2 + $0x28] sm:$0xf] %vm405, %v351
  %417 = vst.msk [vmem:[%s2 + $0x2c] sm:$0xf] %vm405, %v352
  %418 = vst.msk [vmem:[%s2 + $0x30] sm:$0xf] %vm405, %v353
  %419 = vst.msk [vmem:[%s2 + $0x34] sm:$0xf] %vm405, %v354
  %420 = vst.msk [vmem:[%s2 + $0x38] sm:$0xf] %vm405, %v355
  %421 = vst.msk [vmem:[%s2 + $0x3c] sm:$0xf] %vm405, %v356
  %422 = vst.msk [vmem:[%s2 + $0x40] sm:$0xf] %vm405, %v357
  %423 = vst.msk [vmem:[%s2 + $0x44] sm:$0xf] %vm405, %v358
  %424 = vst.msk [vmem:[%s2 + $0x48] sm:$0xf] %vm405, %v359
  %425 = vst.msk [vmem:[%s2 + $0x4c] sm:$0xf] %vm405, %v360
  %426 = vst.msk [vmem:[%s2 + $0x50] sm:$0xf] %vm405, %v361
  %427 = vst.msk [vmem:[%s2 + $0x54] sm:$0xf] %vm405, %v362
  %428 = vst.msk [vmem:[%s2 + $0x58] sm:$0xf] %vm405, %v363
  %429 = vst.msk [vmem:[%s2 + $0x5c] sm:$0xf] %vm405, %v364
  %430 = vst.msk [vmem:[%s2 + $0x60] sm:$0xf] %vm405, %v365
  %431 = vst.msk [vmem:[%s2 + $0x64] sm:$0xf] %vm405, %v366
  %432 = vst.msk [vmem:[%s2 + $0x68] sm:$0xf] %vm405, %v367
  %433 = vst.msk [vmem:[%s2 + $0x6c] sm:$0xf] %vm405, %v368
  %434 = vst.msk [vmem:[%s2 + $0x70] sm:$0xf] %vm405, %v369
  %435 = vst.msk [vmem:[%s2 + $0x74] sm:$0xf] %vm405, %v370
  %436 = vst.msk [vmem:[%s2 + $0x78] sm:$0xf] %vm405, %v371
  %437 = vst.msk [vmem:[%s2 + $0x7c] sm:$0xf] %vm405, %v372
  %470 = vrot.lane.b32.xlu0 %v151, 96
  %v471 = vpop.permute.xlu0 %470
  %472 = vrot.lane.b32.xlu0 %v154, 96
  %v473 = vpop.permute.xlu0 %472
  %474 = vrot.lane.b32.xlu0 %v159, 96
  %v475 = vpop.permute.xlu0 %474
  %476 = vrot.lane.b32.xlu0 %v162, 96
  %v477 = vpop.permute.xlu0 %476
  %478 = vrot.lane.b32.xlu0 %v167, 96
  %v479 = vpop.permute.xlu0 %478
  %480 = vrot.lane.b32.xlu0 %v170, 96
  %v481 = vpop.permute.xlu0 %480
  %482 = vrot.lane.b32.xlu0 %v175, 96
  %v483 = vpop.permute.xlu0 %482
  %484 = vrot.lane.b32.xlu0 %v178, 96
  %v485 = vpop.permute.xlu0 %484
  %486 = vrot.lane.b32.xlu0 %v183, 96
  %v487 = vpop.permute.xlu0 %486
  %488 = vrot.lane.b32.xlu0 %v186, 96
  %v489 = vpop.permute.xlu0 %488
  %490 = vrot.lane.b32.xlu0 %v191, 96
  %v491 = vpop.permute.xlu0 %490
  %492 = vrot.lane.b32.xlu0 %v194, 96
  %v493 = vpop.permute.xlu0 %492
  %494 = vrot.lane.b32.xlu0 %v199, 96
  %v495 = vpop.permute.xlu0 %494
  %496 = vrot.lane.b32.xlu0 %v202, 96
  %v497 = vpop.permute.xlu0 %496
  %498 = vrot.lane.b32.xlu0 %v207, 96
  %v499 = vpop.permute.xlu0 %498
  %500 = vrot.lane.b32.xlu0 %v210, 96
  %v501 = vpop.permute.xlu0 %500
  %502 = vrot.lane.b32.xlu0 %v215, 96
  %v503 = vpop.permute.xlu0 %502
  %504 = vrot.lane.b32.xlu0 %v218, 96
  %v505 = vpop.permute.xlu0 %504
  %506 = vrot.lane.b32.xlu0 %v223, 96
  %v507 = vpop.permute.xlu0 %506
  %508 = vrot.lane.b32.xlu0 %v226, 96
  %v509 = vpop.permute.xlu0 %508
  %510 = vrot.lane.b32.xlu0 %v231, 96
  %v511 = vpop.permute.xlu0 %510
  %512 = vrot.lane.b32.xlu0 %v234, 96
  %v513 = vpop.permute.xlu0 %512
  %514 = vrot.lane.b32.xlu0 %v239, 96
  %v515 = vpop.permute.xlu0 %514
  %516 = vrot.lane.b32.xlu0 %v242, 96
  %v517 = vpop.permute.xlu0 %516
  %518 = vrot.lane.b32.xlu0 %v247, 96
  %v519 = vpop.permute.xlu0 %518
  %520 = vrot.lane.b32.xlu0 %v250, 96
  %v521 = vpop.permute.xlu0 %520
  %522 = vrot.lane.b32.xlu0 %v255, 96
  %v523 = vpop.permute.xlu0 %522
  %524 = vrot.lane.b32.xlu0 %v258, 96
  %v525 = vpop.permute.xlu0 %524
  %526 = vrot.lane.b32.xlu0 %v263, 96
  %v527 = vpop.permute.xlu0 %526
  %528 = vrot.lane.b32.xlu0 %v266, 96
  %v529 = vpop.permute.xlu0 %528
  %530 = vrot.lane.b32.xlu0 %v271, 96
  %v531 = vpop.permute.xlu0 %530
  %532 = vrot.lane.b32.xlu0 %v274, 96
  %v533 = vpop.permute.xlu0 %532
  %566 = vst.msk [vmem:[%s3] sm:$0xff] %vm63, %v471
  %567 = vst.msk [vmem:[%s3 + $0x8] sm:$0xff] %vm63, %v473
  %568 = vst.msk [vmem:[%s3 + $0x10] sm:$0xff] %vm63, %v475
  %569 = vst.msk [vmem:[%s3 + $0x18] sm:$0xff] %vm63, %v477
  %570 = vst.msk [vmem:[%s3 + $0x20] sm:$0xff] %vm63, %v479
  %571 = vst.msk [vmem:[%s3 + $0x28] sm:$0xff] %vm63, %v481
  %572 = vst.msk [vmem:[%s3 + $0x30] sm:$0xff] %vm63, %v483
  %573 = vst.msk [vmem:[%s3 + $0x38] sm:$0xff] %vm63, %v485
  %574 = vst.msk [vmem:[%s3 + $0x40] sm:$0xff] %vm63, %v487
  %575 = vst.msk [vmem:[%s3 + $0x48] sm:$0xff] %vm63, %v489
  %576 = vst.msk [vmem:[%s3 + $0x50] sm:$0xff] %vm63, %v491
  %577 = vst.msk [vmem:[%s3 + $0x58] sm:$0xff] %vm63, %v493
  %578 = vst.msk [vmem:[%s3 + $0x60] sm:$0xff] %vm63, %v495
  %579 = vst.msk [vmem:[%s3 + $0x68] sm:$0xff] %vm63, %v497
  %580 = vst.msk [vmem:[%s3 + $0x70] sm:$0xff] %vm63, %v499
  %581 = vst.msk [vmem:[%s3 + $0x78] sm:$0xff] %vm63, %v501
  %582 = vst.msk [vmem:[%s3 + $0x80] sm:$0xff] %vm63, %v503
  %583 = vst.msk [vmem:[%s3 + $0x88] sm:$0xff] %vm63, %v505
  %584 = vst.msk [vmem:[%s3 + $0x90] sm:$0xff] %vm63, %v507
  %585 = vst.msk [vmem:[%s3 + $0x98] sm:$0xff] %vm63, %v509
  %586 = vst.msk [vmem:[%s3 + $0xa0] sm:$0xff] %vm63, %v511
  %587 = vst.msk [vmem:[%s3 + $0xa8] sm:$0xff] %vm63, %v513
  %588 = vst.msk [vmem:[%s3 + $0xb0] sm:$0xff] %vm63, %v515
  %589 = vst.msk [vmem:[%s3 + $0xb8] sm:$0xff] %vm63, %v517
  %590 = vst.msk [vmem:[%s3 + $0xc0] sm:$0xff] %vm63, %v519
  %591 = vst.msk [vmem:[%s3 + $0xc8] sm:$0xff] %vm63, %v521
  %592 = vst.msk [vmem:[%s3 + $0xd0] sm:$0xff] %vm63, %v523
  %593 = vst.msk [vmem:[%s3 + $0xd8] sm:$0xff] %vm63, %v525
  %594 = vst.msk [vmem:[%s3 + $0xe0] sm:$0xff] %vm63, %v527
  %595 = vst.msk [vmem:[%s3 + $0xe8] sm:$0xff] %vm63, %v529
  %596 = vst.msk [vmem:[%s3 + $0xf0] sm:$0xff] %vm63, %v531
  %597 = vst.msk [vmem:[%s3 + $0xf8] sm:$0xff] %vm63, %v533
  // Predicated region
  $region10: #{tpu_custom_call.1} parent=0 // pred_check
    _
  $region11: #{tpu_custom_call.1} parent=0 // pred_check_branch
    %599 = sbr.rel (0) target = $region13
  $region12: #{tpu_custom_call.1} parent=0 // pred_region
    _
  $region13: #{tpu_custom_call.1} parent=0 // pred_fallthru
    _
  // Predicated region
  $region14: #{tpu_custom_call.1} parent=0 // pred_check
    _
  $region15: #{tpu_custom_call.1} parent=0 // pred_check_branch
    %601 = sbr.rel (0) target = $region17
  $region16: #{tpu_custom_call.1} parent=0 // pred_region
    _
  $region17: #{tpu_custom_call.1} parent=0 // pred_fallthru
    _
  // Predicated region
  $region18: #{tpu_custom_call.1} parent=0 // pred_check
    _
  $region19: #{tpu_custom_call.1} parent=0 // pred_check_branch
    %603 = sbr.rel (0) target = $region21
  $region20: #{tpu_custom_call.1} parent=0 // pred_region
    _
  $region21: #{tpu_custom_call.1} parent=0 // pred_fallthru
    _
  // Predicated region
  $region22: #{tpu_custom_call.1} parent=0 // pred_check
    _
  $region23: #{tpu_custom_call.1} parent=0 // pred_check_branch
    %605 = sbr.rel (0) target = $region25
  $region24: #{tpu_custom_call.1} parent=0 // pred_region
    _
  $region25: #{tpu_custom_call.1} parent=0 // pred_fallthru
    _

</llo_original>
